<compile_context>
chip_gen: v5e
topology: v5e:2x2
jax: 0.10.0
libtpu: 0.0.40
codegen_flags: <defaults>
</compile_context>

<pallas_src>
import jax
import jax.numpy as jnp
from jax.experimental import pallas as pl
from jax.experimental.pallas import tpu as pltpu


def net_rnn_kernel(rnn_p_ref, xT_ref, w01T_ref, b01T_ref, w2T_ref, b2T_ref, outT_ref):
    """One batch-lane tile of the forward pass (batch-in-lane layout).

    rnn_p_ref : SMEM (3*n_layers,) flat: per layer [w_ih, w_hh, b_ih+b_hh] (hidden=1)
    xT_ref    : VMEM (S,  tb)   input, batch along lanes
    w01T_ref  : VMEM (H1, S)    transposed fold of Linear(S,H0) @ Linear(H0,H1)
    b01T_ref  : VMEM (H1, 1)
    w2T_ref   : VMEM (H2, H1),  b2T_ref: (H2, 1)
    outT_ref  : VMEM (H2, tb)   lane-dense output block
    """
    S, TB = xT_ref.shape
    H1 = w01T_ref.shape[0]
    n_layers = rnn_p_ref.shape[0] // 3

    # Hoist all SMEM scalar reads (3 per layer) off the serial tanh chain.
    w_ih = [rnn_p_ref[3 * l + 0] for l in range(n_layers)]
    w_hh = [rnn_p_ref[3 * l + 1] for l in range(n_layers)]
    b_l = [rnn_p_ref[3 * l + 2] for l in range(n_layers)]   # b_ih + b_hh (wrapper-folded)

    xT = xT_ref[...]        # (S, TB)
    w01T = w01T_ref[...]    # (H1, S)

    # Layer-0 input affine for all t in one vectorized VPU op, off the critical path.
    pre0 = w_ih[0] * xT + b_l[0]                         # (S, TB)

    # Folded first dense layer, accumulated transposed, initialized with its bias.
    yT = jnp.broadcast_to(b01T_ref[...], (H1, TB))       # (H1, TB)

    # Multi-layer scalar RNN (tanh), fully unrolled over time & layers (both static).
    # Per wavefront step the critical path is one mul + one add + one tanh.
    h = [jnp.zeros((1, TB), jnp.float32) for _ in range(n_layers)]
    for t in range(S):
        h[0] = jnp.tanh(pre0[t:t + 1, :] + w_hh[0] * h[0])
        for l in range(1, n_layers):
            h[l] = jnp.tanh((w_ih[l] * h[l - 1] + b_l[l]) + w_hh[l] * h[l])
        # Folded dense layer as a VPU broadcast-MAC: (H1,1) x (1,TB) -> (H1,TB).
        # Off the tanh critical path; no rnn_out scratch / store+reload round trip.
        yT = yT + w01T[:, t:t + 1] * h[-1]

    # Dropout(eval) = identity, then ELU (alpha=1.0).  exp only sees the clamped
    # negative branch so the positive side can never overflow.  (Padded edge-block
    # lanes may compute garbage here; they are masked on writeback.)
    yT = jnp.where(yT > 0.0, yT, jnp.exp(jnp.minimum(yT, 0.0)) - 1.0)

    # Final Linear(H1,H2), transposed on the MXU -> lane-dense (H2, TB) store.
    outT_ref[...] = (jnp.dot(w2T_ref[...], yT, preferred_element_type=jnp.float32)
                     + b2T_ref[...])


def _batch_tile(batch):
    """Batch-lane tile size.

    Small batches: single block (block == full array extent, so no (8,128) constraint).
    Large batches: >= 2 lane-aligned blocks so v7x's two TensorCores both get work
    (no effect on v5e/v6e besides a negligible 0.35us extra grid step), capped at 512
    so the (1,tb)/(H1,tb) register rows keep the working set well under 64 vregs.
    """
    if batch < 256:
        return batch
    half = -(-batch // 2)            # cdiv(batch, 2)
    tb = -(-half // 128) * 128       # round up to a lane multiple
    return min(tb, 512)


@jax.jit
def net_rnn_forward(x, rnn_p, w0, b0, w1, b1, w2, b2):
    B, S = x.shape
    H1 = w1.shape[1]
    H2 = w2.shape[1]
    n_layers = rnn_p.shape[1]

    # Fold Linear(S,H0) -> Linear(H0,H1) (Dropout between them is identity in eval):
    #   (r @ w0 + b0) @ w1 + b1  ==  r @ (w0 @ w1) + (b0 @ w1 + b1)
    # Everything is pre-transposed for the batch-in-lane kernel layout.
    w01T = jnp.dot(w1.T, w0.T, preferred_element_type=jnp.float32)        # (H1, S)
    b01T = (jnp.dot(b0, w1, preferred_element_type=jnp.float32) + b1).T   # (H1, 1)
    w2T = w2.T                                                            # (H2, H1)
    b2T = b2.T                                                            # (H2, 1)
    xT = x.T                                                              # (S, B)

    # Fold b_ih + b_hh per RNN layer; flatten to 1-D SMEM (no 2-D [8,128] padding).
    rnn_flat = jnp.stack([rnn_p[0], rnn_p[1], rnn_p[2] + rnn_p[3]], axis=1).reshape(-1)

    tb = _batch_tile(B)
    grid = (pl.cdiv(B, tb),)

    cost = pl.CostEstimate(
        flops=B * (5 * S * n_layers + 2 * S * H1 + 2 * H1 * H2 + 2 * H1 + H2),
        transcendentals=B * (S * n_layers + H1),
        bytes_accessed=4 * (rnn_flat.size + x.size + w01T.size + b01T.size
                            + w2T.size + b2T.size + B * H2),
    )

    grid_spec = pltpu.PrefetchScalarGridSpec(
        num_scalar_prefetch=0,
        grid=grid,
        in_specs=[
            pl.BlockSpec((3 * n_layers,), lambda i: (0,),
                         memory_space=pltpu.MemorySpace.SMEM),
            pl.BlockSpec((S, tb), lambda i: (0, i)),          # xT: batch along lanes
            pl.BlockSpec((H1, S), lambda i: (0, 0)),
            pl.BlockSpec((H1, 1), lambda i: (0, 0)),
            pl.BlockSpec((H2, H1), lambda i: (0, 0)),
            pl.BlockSpec((H2, 1), lambda i: (0, 0)),
        ],
        out_specs=pl.BlockSpec((H2, tb), lambda i: (0, i)),   # lane-dense output block
    )

    outT = pl.pallas_call(
        net_rnn_kernel,
        out_shape=jax.ShapeDtypeStruct((H2, B), jnp.float32),
        grid_spec=grid_spec,
        compiler_params=pltpu.CompilerParams(
            dimension_semantics=("parallel",)),
        cost_estimate=cost,
    )(rnn_flat, xT, w01T, b01T, w2T, b2T)

    return outT.T   # (B, H2)


def reference_forward(x, rnn_p, w0, b0, w1, b1, w2, b2):
    """Pure-JAX reference mirroring PyTorch net_rnn.forward (eval mode), unfolded."""
    B, S = x.shape
    n_layers = rnn_p.shape[1]
    h = [jnp.zeros((B, 1), jnp.float32) for _ in range(n_layers)]
    cols = []
    for t in range(S):
        inp = x[:, t:t + 1]
        for l in range(n_layers):
            h[l] = jnp.tanh(rnn_p[0, l] * inp + rnn_p[2, l]
                            + rnn_p[1, l] * h[l] + rnn_p[3, l])
            inp = h[l]
        cols.append(h[-1])
    rnn_out = jnp.concatenate(cols, axis=1)
    y = rnn_out @ w0 + b0
    y = y @ w1 + b1                       # Dropout = identity in eval
    y = jnp.where(y > 0.0, y, jnp.expm1(jnp.minimum(y, 0.0)))   # ELU, alpha=1.0
    y = y @ w2 + b2
    return y


def init_params(key, seq_length, n_layers, hidden_layers):
    """Deterministic init mimicking PyTorch's uniform(-1/sqrt(fan_in), 1/sqrt(fan_in))."""
    ks = jax.random.split(key, 8)
    # RNN: hidden_size=1 -> bound = 1.0 ; rows = [w_ih, w_hh, b_ih, b_hh]
    rnn_p = jax.random.uniform(ks[0], (4, n_layers), jnp.float32, -1.0, 1.0)

    def linear(k, fan_in, fan_out):
        k_w, k_b = jax.random.split(k)
        bound = 1.0 / jnp.sqrt(jnp.float32(fan_in))
        w = jax.random.uniform(k_w, (fan_in, fan_out), jnp.float32, -bound, bound)
        b = jax.random.uniform(k_b, (1, fan_out), jnp.float32, -bound, bound)
        return w, b

    h0, h1, h2 = hidden_layers
    w0, b0 = linear(ks[1], seq_length, h0)   # Linear(seq_length, h0)
    w1, b1 = linear(ks[2], h0, h1)           # Linear(h0, h1) + Dropout + ELU
    w2, b2 = linear(ks[3], h1, h2)           # Linear(h1, h2)
    return rnn_p, w0, b0, w1, b1, w2, b2


if __name__ == "__main__":
    B = 2
    seq_length = 8
    n_layers = 2
    hidden_layers = [32, 16, 8]

    key = jax.random.PRNGKey(0)
    k_x, k_p = jax.random.split(key)
    x = jax.random.normal(k_x, (B, seq_length), jnp.float32)
    params = init_params(k_p, seq_length, n_layers, hidden_layers)

    out = net_rnn_forward(x, *params)
    out = jax.block_until_ready(out)

    ref = reference_forward(x, *params)
    assert out.shape == (B, hidden_layers[-1]), out.shape
    assert jnp.allclose(out, ref, rtol=1e-5, atol=1e-5), (out, ref)

    print("KERNEL_OK")
</pallas_src>

<mosaic_0001>
module attributes {stable_mosaic.version = 11 : i64} {
  func.func @net_rnn_kernel(%arg0: i32, %arg1: memref<6xf32, #tpu.memory_space<smem>>, %arg2: memref<8x2xf32, #tpu.memory_space<vmem>>, %arg3: memref<16x8xf32, #tpu.memory_space<vmem>>, %arg4: memref<16x1xf32, #tpu.memory_space<vmem>>, %arg5: memref<8x16xf32, #tpu.memory_space<vmem>>, %arg6: memref<8x1xf32, #tpu.memory_space<vmem>>, %arg7: memref<8x2xf32, #tpu.memory_space<vmem>>) attributes {dimension_semantics = [#tpu.dimension_semantics<parallel>], iteration_bounds = array<i64: 1>, scalar_prefetch = 0 : i64, scratch_operands = 0 : i64, tpu.core_type = #tpu.core_type<tc>, window_params = [{transform_indices = @transform_0, window_bounds = array<i64: 6>}, {transform_indices = @transform_1, window_bounds = array<i64: 8, 2>}, {pipeline_mode = #tpu.pipeline_mode<synchronous>, transform_indices = @transform_2, window_bounds = array<i64: 16, 8>}, {pipeline_mode = #tpu.pipeline_mode<synchronous>, transform_indices = @transform_3, window_bounds = array<i64: 16, 1>}, {pipeline_mode = #tpu.pipeline_mode<synchronous>, transform_indices = @transform_4, window_bounds = array<i64: 8, 16>}, {pipeline_mode = #tpu.pipeline_mode<synchronous>, transform_indices = @transform_5, window_bounds = array<i64: 8, 1>}, {transform_indices = @transform_6, window_bounds = array<i64: 8, 2>}]} {
    %c0 = arith.constant 0 : index
    %0 = memref.load %arg1[%c0] : memref<6xf32, #tpu.memory_space<smem>>
    %c3 = arith.constant 3 : index
    %1 = memref.load %arg1[%c3] : memref<6xf32, #tpu.memory_space<smem>>
    %c1 = arith.constant 1 : index
    %2 = memref.load %arg1[%c1] : memref<6xf32, #tpu.memory_space<smem>>
    %c4 = arith.constant 4 : index
    %3 = memref.load %arg1[%c4] : memref<6xf32, #tpu.memory_space<smem>>
    %c2 = arith.constant 2 : index
    %4 = memref.load %arg1[%c2] : memref<6xf32, #tpu.memory_space<smem>>
    %c5 = arith.constant 5 : index
    %5 = memref.load %arg1[%c5] : memref<6xf32, #tpu.memory_space<smem>>
    %c0_0 = arith.constant 0 : index
    %c0_1 = arith.constant 0 : index
    %6 = vector.load %arg2[%c0_0, %c0_1] : memref<8x2xf32, #tpu.memory_space<vmem>>, vector<8x2xf32>
    %c0_2 = arith.constant 0 : index
    %c0_3 = arith.constant 0 : index
    %7 = vector.load %arg3[%c0_2, %c0_3] : memref<16x8xf32, #tpu.memory_space<vmem>>, vector<16x8xf32>
    %8 = vector.broadcast %0 : f32 to vector<8x2xf32>
    %9 = arith.mulf %8, %6 : vector<8x2xf32>
    %10 = vector.broadcast %4 : f32 to vector<8x2xf32>
    %11 = arith.addf %9, %10 : vector<8x2xf32>
    %c0_4 = arith.constant 0 : index
    %c0_5 = arith.constant 0 : index
    %12 = vector.load %arg4[%c0_4, %c0_5] : memref<16x1xf32, #tpu.memory_space<vmem>>, vector<16x1xf32>
    %13 = vector.shape_cast %12 : vector<16x1xf32> to vector<16x1xf32>
    %14 = vector.broadcast %13 : vector<16x1xf32> to vector<16x2xf32>
    %cst = arith.constant 0.000000e+00 : f32
    %15 = vector.broadcast %cst : f32 to vector<1x2xf32>
    %cst_6 = arith.constant 0.000000e+00 : f32
    %16 = vector.broadcast %cst_6 : f32 to vector<1x2xf32>
    %17 = vector.extract_strided_slice %11 {offsets = [0, 0], sizes = [1, 2], strides = [1, 1]} : vector<8x2xf32> to vector<1x2xf32>
    %18 = vector.broadcast %2 : f32 to vector<1x2xf32>
    %19 = arith.mulf %18, %15 : vector<1x2xf32>
    %20 = arith.addf %17, %19 : vector<1x2xf32>
    %21 = math.tanh %20 : vector<1x2xf32>
    %22 = vector.broadcast %1 : f32 to vector<1x2xf32>
    %23 = arith.mulf %22, %21 : vector<1x2xf32>
    %24 = vector.broadcast %5 : f32 to vector<1x2xf32>
    %25 = arith.addf %23, %24 : vector<1x2xf32>
    %26 = vector.broadcast %3 : f32 to vector<1x2xf32>
    %27 = arith.mulf %26, %16 : vector<1x2xf32>
    %28 = arith.addf %25, %27 : vector<1x2xf32>
    %29 = math.tanh %28 : vector<1x2xf32>
    %30 = vector.extract_strided_slice %7 {offsets = [0, 0], sizes = [16, 1], strides = [1, 1]} : vector<16x8xf32> to vector<16x1xf32>
    %31 = vector.broadcast %30 : vector<16x1xf32> to vector<16x2xf32>
    %32 = vector.broadcast %29 : vector<1x2xf32> to vector<16x2xf32>
    %33 = arith.mulf %31, %32 : vector<16x2xf32>
    %34 = arith.addf %14, %33 : vector<16x2xf32>
    %35 = vector.extract_strided_slice %11 {offsets = [1, 0], sizes = [1, 2], strides = [1, 1]} : vector<8x2xf32> to vector<1x2xf32>
    %36 = vector.broadcast %2 : f32 to vector<1x2xf32>
    %37 = arith.mulf %36, %21 : vector<1x2xf32>
    %38 = arith.addf %35, %37 : vector<1x2xf32>
    %39 = math.tanh %38 : vector<1x2xf32>
    %40 = vector.broadcast %1 : f32 to vector<1x2xf32>
    %41 = arith.mulf %40, %39 : vector<1x2xf32>
    %42 = vector.broadcast %5 : f32 to vector<1x2xf32>
    %43 = arith.addf %41, %42 : vector<1x2xf32>
    %44 = vector.broadcast %3 : f32 to vector<1x2xf32>
    %45 = arith.mulf %44, %29 : vector<1x2xf32>
    %46 = arith.addf %43, %45 : vector<1x2xf32>
    %47 = math.tanh %46 : vector<1x2xf32>
    %48 = vector.extract_strided_slice %7 {offsets = [0, 1], sizes = [16, 1], strides = [1, 1]} : vector<16x8xf32> to vector<16x1xf32>
    %49 = vector.broadcast %48 : vector<16x1xf32> to vector<16x2xf32>
    %50 = vector.broadcast %47 : vector<1x2xf32> to vector<16x2xf32>
    %51 = arith.mulf %49, %50 : vector<16x2xf32>
    %52 = arith.addf %34, %51 : vector<16x2xf32>
    %53 = vector.extract_strided_slice %11 {offsets = [2, 0], sizes = [1, 2], strides = [1, 1]} : vector<8x2xf32> to vector<1x2xf32>
    %54 = vector.broadcast %2 : f32 to vector<1x2xf32>
    %55 = arith.mulf %54, %39 : vector<1x2xf32>
    %56 = arith.addf %53, %55 : vector<1x2xf32>
    %57 = math.tanh %56 : vector<1x2xf32>
    %58 = vector.broadcast %1 : f32 to vector<1x2xf32>
    %59 = arith.mulf %58, %57 : vector<1x2xf32>
    %60 = vector.broadcast %5 : f32 to vector<1x2xf32>
    %61 = arith.addf %59, %60 : vector<1x2xf32>
    %62 = vector.broadcast %3 : f32 to vector<1x2xf32>
    %63 = arith.mulf %62, %47 : vector<1x2xf32>
    %64 = arith.addf %61, %63 : vector<1x2xf32>
    %65 = math.tanh %64 : vector<1x2xf32>
    %66 = vector.extract_strided_slice %7 {offsets = [0, 2], sizes = [16, 1], strides = [1, 1]} : vector<16x8xf32> to vector<16x1xf32>
    %67 = vector.broadcast %66 : vector<16x1xf32> to vector<16x2xf32>
    %68 = vector.broadcast %65 : vector<1x2xf32> to vector<16x2xf32>
    %69 = arith.mulf %67, %68 : vector<16x2xf32>
    %70 = arith.addf %52, %69 : vector<16x2xf32>
    %71 = vector.extract_strided_slice %11 {offsets = [3, 0], sizes = [1, 2], strides = [1, 1]} : vector<8x2xf32> to vector<1x2xf32>
    %72 = vector.broadcast %2 : f32 to vector<1x2xf32>
    %73 = arith.mulf %72, %57 : vector<1x2xf32>
    %74 = arith.addf %71, %73 : vector<1x2xf32>
    %75 = math.tanh %74 : vector<1x2xf32>
    %76 = vector.broadcast %1 : f32 to vector<1x2xf32>
    %77 = arith.mulf %76, %75 : vector<1x2xf32>
    %78 = vector.broadcast %5 : f32 to vector<1x2xf32>
    %79 = arith.addf %77, %78 : vector<1x2xf32>
    %80 = vector.broadcast %3 : f32 to vector<1x2xf32>
    %81 = arith.mulf %80, %65 : vector<1x2xf32>
    %82 = arith.addf %79, %81 : vector<1x2xf32>
    %83 = math.tanh %82 : vector<1x2xf32>
    %84 = vector.extract_strided_slice %7 {offsets = [0, 3], sizes = [16, 1], strides = [1, 1]} : vector<16x8xf32> to vector<16x1xf32>
    %85 = vector.broadcast %84 : vector<16x1xf32> to vector<16x2xf32>
    %86 = vector.broadcast %83 : vector<1x2xf32> to vector<16x2xf32>
    %87 = arith.mulf %85, %86 : vector<16x2xf32>
    %88 = arith.addf %70, %87 : vector<16x2xf32>
    %89 = vector.extract_strided_slice %11 {offsets = [4, 0], sizes = [1, 2], strides = [1, 1]} : vector<8x2xf32> to vector<1x2xf32>
    %90 = vector.broadcast %2 : f32 to vector<1x2xf32>
    %91 = arith.mulf %90, %75 : vector<1x2xf32>
    %92 = arith.addf %89, %91 : vector<1x2xf32>
    %93 = math.tanh %92 : vector<1x2xf32>
    %94 = vector.broadcast %1 : f32 to vector<1x2xf32>
    %95 = arith.mulf %94, %93 : vector<1x2xf32>
    %96 = vector.broadcast %5 : f32 to vector<1x2xf32>
    %97 = arith.addf %95, %96 : vector<1x2xf32>
    %98 = vector.broadcast %3 : f32 to vector<1x2xf32>
    %99 = arith.mulf %98, %83 : vector<1x2xf32>
    %100 = arith.addf %97, %99 : vector<1x2xf32>
    %101 = math.tanh %100 : vector<1x2xf32>
    %102 = vector.extract_strided_slice %7 {offsets = [0, 4], sizes = [16, 1], strides = [1, 1]} : vector<16x8xf32> to vector<16x1xf32>
    %103 = vector.broadcast %102 : vector<16x1xf32> to vector<16x2xf32>
    %104 = vector.broadcast %101 : vector<1x2xf32> to vector<16x2xf32>
    %105 = arith.mulf %103, %104 : vector<16x2xf32>
    %106 = arith.addf %88, %105 : vector<16x2xf32>
    %107 = vector.extract_strided_slice %11 {offsets = [5, 0], sizes = [1, 2], strides = [1, 1]} : vector<8x2xf32> to vector<1x2xf32>
    %108 = vector.broadcast %2 : f32 to vector<1x2xf32>
    %109 = arith.mulf %108, %93 : vector<1x2xf32>
    %110 = arith.addf %107, %109 : vector<1x2xf32>
    %111 = math.tanh %110 : vector<1x2xf32>
    %112 = vector.broadcast %1 : f32 to vector<1x2xf32>
    %113 = arith.mulf %112, %111 : vector<1x2xf32>
    %114 = vector.broadcast %5 : f32 to vector<1x2xf32>
    %115 = arith.addf %113, %114 : vector<1x2xf32>
    %116 = vector.broadcast %3 : f32 to vector<1x2xf32>
    %117 = arith.mulf %116, %101 : vector<1x2xf32>
    %118 = arith.addf %115, %117 : vector<1x2xf32>
    %119 = math.tanh %118 : vector<1x2xf32>
    %120 = vector.extract_strided_slice %7 {offsets = [0, 5], sizes = [16, 1], strides = [1, 1]} : vector<16x8xf32> to vector<16x1xf32>
    %121 = vector.broadcast %120 : vector<16x1xf32> to vector<16x2xf32>
    %122 = vector.broadcast %119 : vector<1x2xf32> to vector<16x2xf32>
    %123 = arith.mulf %121, %122 : vector<16x2xf32>
    %124 = arith.addf %106, %123 : vector<16x2xf32>
    %125 = vector.extract_strided_slice %11 {offsets = [6, 0], sizes = [1, 2], strides = [1, 1]} : vector<8x2xf32> to vector<1x2xf32>
    %126 = vector.broadcast %2 : f32 to vector<1x2xf32>
    %127 = arith.mulf %126, %111 : vector<1x2xf32>
    %128 = arith.addf %125, %127 : vector<1x2xf32>
    %129 = math.tanh %128 : vector<1x2xf32>
    %130 = vector.broadcast %1 : f32 to vector<1x2xf32>
    %131 = arith.mulf %130, %129 : vector<1x2xf32>
    %132 = vector.broadcast %5 : f32 to vector<1x2xf32>
    %133 = arith.addf %131, %132 : vector<1x2xf32>
    %134 = vector.broadcast %3 : f32 to vector<1x2xf32>
    %135 = arith.mulf %134, %119 : vector<1x2xf32>
    %136 = arith.addf %133, %135 : vector<1x2xf32>
    %137 = math.tanh %136 : vector<1x2xf32>
    %138 = vector.extract_strided_slice %7 {offsets = [0, 6], sizes = [16, 1], strides = [1, 1]} : vector<16x8xf32> to vector<16x1xf32>
    %139 = vector.broadcast %138 : vector<16x1xf32> to vector<16x2xf32>
    %140 = vector.broadcast %137 : vector<1x2xf32> to vector<16x2xf32>
    %141 = arith.mulf %139, %140 : vector<16x2xf32>
    %142 = arith.addf %124, %141 : vector<16x2xf32>
    %143 = vector.extract_strided_slice %11 {offsets = [7, 0], sizes = [1, 2], strides = [1, 1]} : vector<8x2xf32> to vector<1x2xf32>
    %144 = vector.broadcast %2 : f32 to vector<1x2xf32>
    %145 = arith.mulf %144, %129 : vector<1x2xf32>
    %146 = arith.addf %143, %145 : vector<1x2xf32>
    %147 = math.tanh %146 : vector<1x2xf32>
    %148 = vector.broadcast %1 : f32 to vector<1x2xf32>
    %149 = arith.mulf %148, %147 : vector<1x2xf32>
    %150 = vector.broadcast %5 : f32 to vector<1x2xf32>
    %151 = arith.addf %149, %150 : vector<1x2xf32>
    %152 = vector.broadcast %3 : f32 to vector<1x2xf32>
    %153 = arith.mulf %152, %137 : vector<1x2xf32>
    %154 = arith.addf %151, %153 : vector<1x2xf32>
    %155 = math.tanh %154 : vector<1x2xf32>
    %156 = vector.extract_strided_slice %7 {offsets = [0, 7], sizes = [16, 1], strides = [1, 1]} : vector<16x8xf32> to vector<16x1xf32>
    %157 = vector.broadcast %156 : vector<16x1xf32> to vector<16x2xf32>
    %158 = vector.broadcast %155 : vector<1x2xf32> to vector<16x2xf32>
    %159 = arith.mulf %157, %158 : vector<16x2xf32>
    %160 = arith.addf %142, %159 : vector<16x2xf32>
    %cst_7 = arith.constant 0.000000e+00 : f32
    %161 = vector.broadcast %cst_7 : f32 to vector<16x2xf32>
    %162 = arith.cmpf ogt, %160, %161 : vector<16x2xf32>
    %cst_8 = arith.constant 0.000000e+00 : f32
    %163 = vector.broadcast %cst_8 : f32 to vector<16x2xf32>
    %164 = arith.minimumf %160, %163 : vector<16x2xf32>
    %165 = math.exp %164 : vector<16x2xf32>
    %cst_9 = arith.constant 1.000000e+00 : f32
    %166 = vector.broadcast %cst_9 : f32 to vector<16x2xf32>
    %167 = arith.subf %165, %166 : vector<16x2xf32>
    %168 = arith.select %162, %160, %167 : vector<16x2xi1>, vector<16x2xf32>
    %c0_10 = arith.constant 0 : index
    %c0_11 = arith.constant 0 : index
    %169 = vector.load %arg5[%c0_10, %c0_11] : memref<8x16xf32, #tpu.memory_space<vmem>>, vector<8x16xf32>
    %cst_12 = arith.constant dense<0.000000e+00> : vector<8x2xf32>
    %170 = tpu.matmul %169, %168, %cst_12 {dimension_numbers = #tpu.dot_dimension_numbers<[1], [0], [0], [1], [0, 0, 1, 1], [], []>} : vector<8x16xf32>, vector<16x2xf32>, vector<8x2xf32> -> vector<8x2xf32>
    %c0_13 = arith.constant 0 : index
    %c0_14 = arith.constant 0 : index
    %171 = vector.load %arg6[%c0_13, %c0_14] : memref<8x1xf32, #tpu.memory_space<vmem>>, vector<8x1xf32>
    %172 = vector.broadcast %171 : vector<8x1xf32> to vector<8x2xf32>
    %173 = arith.addf %170, %172 : vector<8x2xf32>
    %c0_15 = arith.constant 0 : index
    %c0_16 = arith.constant 0 : index
    %174 = vector.load %arg7[%c0_15, %c0_16] : memref<8x2xf32, #tpu.memory_space<vmem>>, vector<8x2xf32>
    tpu.vector_store %arg7[%c0_15, %c0_16], %173 {strides = array<i32>} : memref<8x2xf32, #tpu.memory_space<vmem>>, vector<8x2xf32>,
    return
  }
  func.func @transform_0(%arg0: i32) -> i32 {
    %c0_i32 = arith.constant 0 : i32
    %c0_i32_0 = arith.constant 0 : i32
    return %c0_i32 : i32
  }
  func.func @transform_1(%arg0: i32) -> (i32, i32) {
    %c0_i32 = arith.constant 0 : i32
    %c0_i32_0 = arith.constant 0 : i32
    return %c0_i32, %arg0 : i32, i32
  }
  func.func @transform_2(%arg0: i32) -> (i32, i32) {
    %c0_i32 = arith.constant 0 : i32
    %c0_i32_0 = arith.constant 0 : i32
    %c0_i32_1 = arith.constant 0 : i32
    return %c0_i32, %c0_i32_0 : i32, i32
  }
  func.func @transform_3(%arg0: i32) -> (i32, i32) {
    %c0_i32 = arith.constant 0 : i32
    %c0_i32_0 = arith.constant 0 : i32
    %c0_i32_1 = arith.constant 0 : i32
    return %c0_i32, %c0_i32_0 : i32, i32
  }
  func.func @transform_4(%arg0: i32) -> (i32, i32) {
    %c0_i32 = arith.constant 0 : i32
    %c0_i32_0 = arith.constant 0 : i32
    %c0_i32_1 = arith.constant 0 : i32
    return %c0_i32, %c0_i32_0 : i32, i32
  }
  func.func @transform_5(%arg0: i32) -> (i32, i32) {
    %c0_i32 = arith.constant 0 : i32
    %c0_i32_0 = arith.constant 0 : i32
    %c0_i32_1 = arith.constant 0 : i32
    return %c0_i32, %c0_i32_0 : i32, i32
  }
  func.func @transform_6(%arg0: i32) -> (i32, i32) {
    %c0_i32 = arith.constant 0 : i32
    %c0_i32_0 = arith.constant 0 : i32
    return %c0_i32, %arg0 : i32, i32
  }
}

</mosaic_0001>

<llo_original>
// kernel: net_rnn_forward.1
$region0: #{net_rnn_forward.1}
  #allocation0 [shape = 'u32[]', space=smem, size = 0x4, offset = 0x4, fixed_abs, tag = 'smem constant byte address 0x4 - core index']
  #allocation1 [shape = 'u32[72,128]{1,0:T(1,128)}', space=vmem, size = 0x9000, scoped, tag = 'internal scratch']
  %s0 = inlined_call_operand.vmem [shape: f32[6], index: 0, kind: input, shape index: {}]
  %s1 = inlined_call_operand.vmem [shape: f32[8,2], index: 1, kind: input, shape index: {}]
  %s2 = inlined_call_operand.vmem [shape: f32[16,8], index: 2, kind: input, shape index: {}]
  %s3 = inlined_call_operand.vmem [shape: f32[16,1], index: 3, kind: input, shape index: {}]
  %s4 = inlined_call_operand.vmem [shape: f32[8,16], index: 4, kind: input, shape index: {}]
  %s5 = inlined_call_operand.vmem [shape: f32[8,1], index: 5, kind: input, shape index: {}]
  %s6 = inlined_call_operand.vmem [shape: f32[8,2], index: 6, kind: output, shape index: {}]
  %s7 = sld [smem:[#allocation0]]
  $region38: #{net_rnn_forward.1} parent=0
    _
  %s9 = ssub.s32 1, %s7
  %s10 = scalar_select 0, %s9, %s7
  $region1: #{net_rnn_forward.1} parent=0
    #allocation2 [shape = 'u8[512]{0}', space=smem, size = 0x200, scoped, tag = 'input window, operand 0, single buffered']
    #allocation3 [shape = 's32[1]{0}', space=sflag, size = 0x4, scoped, tag = 'scoped memory for net_rnn_forward.1']
    %11 = vsyncpa [#allocation3], 0
    // Predicated region
    $region2: #{net_rnn_forward.1} parent=1 // pred_check
      _
    $region3: #{net_rnn_forward.1} parent=1 // pred_check_branch
      %13 = sbr.rel (0) target = $region5
    $region4: #{net_rnn_forward.1} parent=1 // pred_region
      %15 = vsyncadd [#allocation3], 0
      %s17 = sshll.u32 %s0, 4
      %s18 = int_to_ptr.vmem [resolvable:$true] %s17
      %20 = dma.vmem_to_smem %s18, 16, [#allocation2], [#allocation3]
    $region5: #{net_rnn_forward.1} parent=1 // pred_fallthru
      _
    // Predicated region
    $region6: #{net_rnn_forward.1} parent=1 // pred_check
      _
    $region7: #{net_rnn_forward.1} parent=1 // pred_check_branch
      %22 = sbr.rel (0) target = $region9
    $region8: #{net_rnn_forward.1} parent=1 // pred_region
      _
    $region9: #{net_rnn_forward.1} parent=1 // pred_fallthru
      _
    // Predicated region
    $region10: #{net_rnn_forward.1} parent=1 // pred_check
      _
    $region11: #{net_rnn_forward.1} parent=1 // pred_check_branch
      %24 = sbr.rel (0) target = $region13
    $region12: #{net_rnn_forward.1} parent=1 // pred_region
      _
    $region13: #{net_rnn_forward.1} parent=1 // pred_fallthru
      _
    // Predicated region
    $region14: #{net_rnn_forward.1} parent=1 // pred_check
      _
    $region15: #{net_rnn_forward.1} parent=1 // pred_check_branch
      %26 = sbr.rel (0) target = $region17
    $region16: #{net_rnn_forward.1} parent=1 // pred_region
      _
    $region17: #{net_rnn_forward.1} parent=1 // pred_fallthru
      _
    // Predicated region
    $region18: #{net_rnn_forward.1} parent=1 // pred_check
      _
    $region19: #{net_rnn_forward.1} parent=1 // pred_check_branch
      %28 = sbr.rel (0) target = $region21
    $region20: #{net_rnn_forward.1} parent=1 // pred_region
      _
    $region21: #{net_rnn_forward.1} parent=1 // pred_fallthru
      _
    // Predicated region
    $region22: #{net_rnn_forward.1} parent=1 // pred_check
      _
    $region23: #{net_rnn_forward.1} parent=1 // pred_check_branch
      %30 = sbr.rel (0) target = $region25
    $region24: #{net_rnn_forward.1} parent=1 // pred_region
      _
    $region25: #{net_rnn_forward.1} parent=1 // pred_fallthru
      _
    // Predicated region
    $region26: #{net_rnn_forward.1} parent=1 // pred_check
      _
    $region27: #{net_rnn_forward.1} parent=1 // pred_check_branch
      %32 = sbr.rel (0) target = $region29
    $region28: #{net_rnn_forward.1} parent=1 // pred_region
      %34 = dma.done [#allocation3], 16
    $region29: #{net_rnn_forward.1} parent=1 // pred_fallthru
      _
    %35 = sfence
    %s36 = sld [smem:[#allocation2]]
    %s37 = sld [smem:[#allocation2 + $0x3]]
    %s38 = sld [smem:[#allocation2 + $0x1]]
    %s39 = sld [smem:[#allocation2 + $0x4]]
    %s40 = sld [smem:[#allocation2 + $0x2]]
    %s41 = sld [smem:[#allocation2 + $0x5]]
    %v42 = vld [vmem:[%s1] sm:$0xff]
    %v43 = vld [vmem:[%s2] sm:$0xff]
    %v44 = vld [vmem:[%s2 + $0x8] sm:$0xff]
    %v45 = vstv %s36
    %v46 = vmul.f32 %v45, %v42
    %v47 = vstv %s40
    %v48 = vadd.f32 %v46, %v47
    %v49 = vld [vmem:[%s3] sm:$0xff]
    %v50 = vld [vmem:[%s3 + $0x8] sm:$0xff]
    %52 = vset.pattern.permute.xlu0 0
    %53 = vperm.xlu0 %52, %v49
    %v54 = vpop.permute.xlu0 %53
    %57 = vset.pattern.permute.xlu0 0
    %58 = vperm.xlu0 %57, %v50
    %v59 = vpop.permute.xlu0 %58
    %v61 = vstv %s38
    %v62 = vmul.f32 %v61, 0.0
    %v63 = vadd.f32 %v48, %v62
    %v64 = vtanh.pop %v63
    %v65 = vstv %s37
    %v66 = vmul.f32 %v65, %v64
    %v67 = vstv %s41
    %v68 = vadd.f32 %v66, %v67
    %v69 = vstv %s39
    %v70 = vmul.f32 %v69, 0.0
    %v71 = vadd.f32 %v68, %v70
    %v72 = vtanh.pop %v71
    %74 = vset.pattern.permute.xlu0 0
    %75 = vperm.xlu0 %74, %v43
    %v76 = vpop.permute.xlu0 %75
    %79 = vset.pattern.permute.xlu0 0
    %80 = vperm.xlu0 %79, %v44
    %v81 = vpop.permute.xlu0 %80
    %v83 = vperm.slane %v72, 0
    %v84 = vmul.f32 %v76, %v83
    %v85 = vmul.f32 %v81, %v83
    %v86 = vadd.f32 %v54, %v84
    %v87 = vadd.f32 %v59, %v85
    %v88 = vmul.f32 %v61, %v64
    %v90 = vrot.slane %v88, 7
    %v92 = vadd.f32 %v48, %v90
    %v93 = vtanh.pop %v92
    %v94 = vmul.f32 %v65, %v93
    %v95 = vadd.f32 %v94, %v67
    %v96 = vmul.f32 %v69, %v72
    %v98 = vrot.slane %v96, 7
    %v100 = vadd.f32 %v95, %v98
    %v101 = vtanh.pop %v100
    %102 = vset.pattern.permute.xlu0 1
    %103 = vperm.xlu0 %102, %v43
    %v104 = vpop.permute.xlu0 %103
    %106 = vset.pattern.permute.xlu0 1
    %107 = vperm.xlu0 %106, %v44
    %v108 = vpop.permute.xlu0 %107
    %v110 = vperm.slane %v101, 1
    %v111 = vmul.f32 %v104, %v110
    %v112 = vmul.f32 %v108, %v110
    %v113 = vadd.f32 %v86, %v111
    %v114 = vadd.f32 %v87, %v112
    %v115 = vmul.f32 %v61, %v93
    %v117 = vrot.slane %v115, 7
    %v119 = vadd.f32 %v48, %v117
    %v120 = vtanh.pop %v119
    %v121 = vmul.f32 %v65, %v120
    %v122 = vadd.f32 %v121, %v67
    %v123 = vmul.f32 %v69, %v101
    %v125 = vrot.slane %v123, 7
    %v127 = vadd.f32 %v122, %v125
    %v128 = vtanh.pop %v127
    %129 = vset.pattern.permute.xlu0 2
    %130 = vperm.xlu0 %129, %v43
    %v131 = vpop.permute.xlu0 %130
    %133 = vset.pattern.permute.xlu0 2
    %134 = vperm.xlu0 %133, %v44
    %v135 = vpop.permute.xlu0 %134
    %v137 = vperm.slane %v128, 2
    %v138 = vmul.f32 %v131, %v137
    %v139 = vmul.f32 %v135, %v137
    %v140 = vadd.f32 %v113, %v138
    %v141 = vadd.f32 %v114, %v139
    %v142 = vmul.f32 %v61, %v120
    %v144 = vrot.slane %v142, 7
    %v146 = vadd.f32 %v48, %v144
    %v147 = vtanh.pop %v146
    %v148 = vmul.f32 %v65, %v147
    %v149 = vadd.f32 %v148, %v67
    %v150 = vmul.f32 %v69, %v128
    %v152 = vrot.slane %v150, 7
    %v154 = vadd.f32 %v149, %v152
    %v155 = vtanh.pop %v154
    %156 = vset.pattern.permute.xlu0 3
    %157 = vperm.xlu0 %156, %v43
    %v158 = vpop.permute.xlu0 %157
    %160 = vset.pattern.permute.xlu0 3
    %161 = vperm.xlu0 %160, %v44
    %v162 = vpop.permute.xlu0 %161
    %v164 = vperm.slane %v155, 3
    %v165 = vmul.f32 %v158, %v164
    %v166 = vmul.f32 %v162, %v164
    %v167 = vadd.f32 %v140, %v165
    %v168 = vadd.f32 %v141, %v166
    %v169 = vmul.f32 %v61, %v147
    %v171 = vrot.slane %v169, 7
    %v173 = vadd.f32 %v48, %v171
    %v174 = vtanh.pop %v173
    %v175 = vmul.f32 %v65, %v174
    %v176 = vadd.f32 %v175, %v67
    %v177 = vmul.f32 %v69, %v155
    %v179 = vrot.slane %v177, 7
    %v181 = vadd.f32 %v176, %v179
    %v182 = vtanh.pop %v181
    %183 = vset.pattern.permute.xlu0 4
    %184 = vperm.xlu0 %183, %v43
    %v185 = vpop.permute.xlu0 %184
    %187 = vset.pattern.permute.xlu0 4
    %188 = vperm.xlu0 %187, %v44
    %v189 = vpop.permute.xlu0 %188
    %v191 = vperm.slane %v182, 4
    %v192 = vmul.f32 %v185, %v191
    %v193 = vmul.f32 %v189, %v191
    %v194 = vadd.f32 %v167, %v192
    %v195 = vadd.f32 %v168, %v193
    %v196 = vmul.f32 %v61, %v174
    %v198 = vrot.slane %v196, 7
    %v200 = vadd.f32 %v48, %v198
    %v201 = vtanh.pop %v200
    %v202 = vmul.f32 %v65, %v201
    %v203 = vadd.f32 %v202, %v67
    %v204 = vmul.f32 %v69, %v182
    %v206 = vrot.slane %v204, 7
    %v208 = vadd.f32 %v203, %v206
    %v209 = vtanh.pop %v208
    %210 = vset.pattern.permute.xlu0 5
    %211 = vperm.xlu0 %210, %v43
    %v212 = vpop.permute.xlu0 %211
    %214 = vset.pattern.permute.xlu0 5
    %215 = vperm.xlu0 %214, %v44
    %v216 = vpop.permute.xlu0 %215
    %v218 = vperm.slane %v209, 5
    %v219 = vmul.f32 %v212, %v218
    %v220 = vmul.f32 %v216, %v218
    %v221 = vadd.f32 %v194, %v219
    %v222 = vadd.f32 %v195, %v220
    %v223 = vmul.f32 %v61, %v201
    %v225 = vrot.slane %v223, 7
    %v227 = vadd.f32 %v48, %v225
    %v228 = vtanh.pop %v227
    %v229 = vmul.f32 %v65, %v228
    %v230 = vadd.f32 %v229, %v67
    %v231 = vmul.f32 %v69, %v209
    %v233 = vrot.slane %v231, 7
    %v235 = vadd.f32 %v230, %v233
    %v236 = vtanh.pop %v235
    %237 = vset.pattern.permute.xlu0 6
    %238 = vperm.xlu0 %237, %v43
    %v239 = vpop.permute.xlu0 %238
    %241 = vset.pattern.permute.xlu0 6
    %242 = vperm.xlu0 %241, %v44
    %v243 = vpop.permute.xlu0 %242
    %v245 = vperm.slane %v236, 6
    %v246 = vmul.f32 %v239, %v245
    %v247 = vmul.f32 %v243, %v245
    %v248 = vadd.f32 %v221, %v246
    %v249 = vadd.f32 %v222, %v247
    %v250 = vmul.f32 %v61, %v228
    %v252 = vrot.slane %v250, 7
    %v254 = vadd.f32 %v48, %v252
    %v255 = vtanh.pop %v254
    %v256 = vmul.f32 %v65, %v255
    %v257 = vadd.f32 %v256, %v67
    %v258 = vmul.f32 %v69, %v236
    %v260 = vrot.slane %v258, 7
    %v262 = vadd.f32 %v257, %v260
    %v263 = vtanh.pop %v262
    %264 = vset.pattern.permute.xlu0 7
    %265 = vperm.xlu0 %264, %v43
    %v266 = vpop.permute.xlu0 %265
    %268 = vset.pattern.permute.xlu0 7
    %269 = vperm.xlu0 %268, %v44
    %v270 = vpop.permute.xlu0 %269
    %v272 = vperm.slane %v263, 7
    %v273 = vmul.f32 %v266, %v272
    %v274 = vmul.f32 %v270, %v272
    %v275 = vadd.f32 %v248, %v273
    %v276 = vadd.f32 %v249, %v274
    %vm277 = vcmp.gt.f32.partialorder %v275, 0.0
    %vm278 = vcmp.gt.f32.partialorder %v276, 0.0
    %v279 = vmin.f32 %v275, 0.0
    %v280 = vmin.f32 %v276, 0.0
    %v281 = vmul.f32 %v279, 1.442695
    %v282 = vpow.pop %v281
    %v283 = vmul.f32 %v280, 1.442695
    %v284 = vpow.pop %v283
    %v285 = vsub.f32 %v282, 1.0
    %v286 = vsub.f32 %v284, 1.0
    %v287 = vsel %vm277, %v275, %v285
    %v288 = vsel %vm278, %v276, %v286
    %v289 = vld [vmem:[%s4] sm:$0xff]
    %v290 = vld [vmem:[%s5] sm:$0xff]
    %292 = vset.pattern.permute.xlu0 0
    %293 = vperm.xlu0 %292, %v290
    %v294 = vpop.permute.xlu0 %293
    %vm296 = vcmask 130048
    %v298 = vsel %vm296, %v289, 0
    %300 = vmatpush.msra.mxu0 0.0
    %301 = vmatpush.msra.mxu0 0.0
    %302 = vmatpush.msra.mxu0 0.0
    %303 = vmatpush.msra.mxu0 0.0
    %304 = vmatpush.msra.mxu0 0.0
    %305 = vmatpush.msra.mxu0 0.0
    %306 = vmatpush.msra.mxu0 0.0
    %307 = vmatpush.msra.mxu0 0.0
    %308 = vmatpush.msra.mxu0 0.0
    %309 = vmatpush.msra.mxu0 0.0
    %310 = vmatpush.msra.mxu0 0.0
    %311 = vmatpush.msra.mxu0 0.0
    %312 = vmatpush.msra.mxu0 0.0
    %313 = vmatpush.msra.mxu0 0.0
    %314 = vmatpush.msra.mxu0 %v288
    %315 = vmatpush.msra.mxu0 %v287
    %316 = vmatmul.f32.gmra.mxu0 %v298
    %v317 = vpop.f32.mrf.mxu0
    %v318 = vadd.f32 %v294, %v317
    %319 = vdwg.mxu0
    %vm320 = vcmask 15360
    %321 = vst.msk [vmem:[%s6] sm:$0xff] %vm320, %v318
    // Predicated region
    $region30: #{net_rnn_forward.1} parent=1 // pred_check
      _
    $region31: #{net_rnn_forward.1} parent=1 // pred_check_branch
      %323 = sbr.rel (0) target = $region33
    $region32: #{net_rnn_forward.1} parent=1 // pred_region
      _
    $region33: #{net_rnn_forward.1} parent=1 // pred_fallthru
      _
    // Predicated region
    $region34: #{net_rnn_forward.1} parent=1 // pred_check
      _
    $region35: #{net_rnn_forward.1} parent=1 // pred_check_branch
      %325 = sbr.rel (0) target = $region37
    $region36: #{net_rnn_forward.1} parent=1 // pred_region
      _
    $region37: #{net_rnn_forward.1} parent=1 // pred_fallthru
      _
    %326 = vsyncpa [#allocation3], 1

</llo_original>
